<compile_context>
chip_gen: v6e
topology: v6e:2x2x1
jax: 0.10.0
libtpu: 0.0.40
codegen_flags: <defaults>
</compile_context>

<pallas_src>
import functools
import math

import jax
import jax.numpy as jnp
from jax.experimental import pallas as pl
from jax.experimental.pallas import tpu as pltpu

LOG_STD_MIN = -5.0
LOG_STD_MAX = 2.0

# SELU constants (match torch.nn.functional.selu)
_SELU_ALPHA = 1.6732632423543772
_SELU_SCALE = 1.0507009873554805

_BIG = 3.0e38  # "no clamp" bound for the mean columns


def _selu(x):
    # Negative branch argument clamped to <= 0 so exp never overflows on the
    # discarded side of the select.
    neg = _SELU_ALPHA * (jnp.exp(jnp.minimum(x, 0.0)) - 1.0)
    return _SELU_SCALE * jnp.where(x > 0, x, neg)


def _policy_kernel(state_ref, w1_ref, wh_ref, ball_ref, whead_ref, bhead_ref,
                   lo_ref, hi_ref, out_ref, *, num_layers):
    """One batch tile: full MLP + fused (mean | log_std) head, narrow store."""
    x = state_ref[...]                                   # (tm, obs_dim)

    # Layer 1: (tm, obs) @ (obs, hidden)
    x = _selu(jnp.dot(x, w1_ref[...], preferred_element_type=jnp.float32)
              + ball_ref[0:1, :])

    # Hidden layers 2..L: (tm, hidden) @ (hidden, hidden)   (static unroll)
    for l in range(num_layers - 1):
        w = wh_ref[l]                                     # (hidden, hidden)
        b = ball_ref[l + 1:l + 2, :]                      # (1, hidden)
        x = _selu(jnp.dot(x, w, preferred_element_type=jnp.float32) + b)

    # Fused head: columns [0, A) = mean, [A, 2A) = log_std. No padding.
    y = jnp.dot(x, whead_ref[...], preferred_element_type=jnp.float32) \
        + bhead_ref[...]                                  # (tm, 2A)

    # Per-lane clamp bounds precomputed outside the kernel:
    #   mean cols:    [-BIG, +BIG]  (no-op)
    #   log_std cols: [LOG_STD_MIN, LOG_STD_MAX]
    y = jnp.minimum(jnp.maximum(y, lo_ref[...]), hi_ref[...])

    out_ref[...] = y


def _xavier_uniform(key, out_dim, in_dim, gain=1.0):
    bound = gain * math.sqrt(6.0 / (in_dim + out_dim))
    return jax.random.uniform(key, (out_dim, in_dim), jnp.float32, -bound, bound)


def init_params(key, observation_dim, action_dim, hidden_dim=32, num_layers=2):
    """PyTorch-layout params: weights (out_features, in_features), biases 1D."""
    ks = jax.random.split(key, num_layers + 2)
    params = {
        "w1": _xavier_uniform(ks[0], hidden_dim, observation_dim),
        "b1": jnp.zeros((hidden_dim,), jnp.float32),
    }
    for l in range(2, num_layers + 1):
        params[f"w{l}"] = _xavier_uniform(ks[l - 1], hidden_dim, hidden_dim)
        params[f"b{l}"] = jnp.zeros((hidden_dim,), jnp.float32)
    # mean_linear re-initialized with gain=0.001 (as in the module __init__)
    params["wm"] = _xavier_uniform(ks[num_layers], action_dim, hidden_dim, gain=0.001)
    params["bm"] = jnp.zeros((action_dim,), jnp.float32)
    params["ws"] = _xavier_uniform(ks[num_layers + 1], action_dim, hidden_dim)
    params["bs"] = jnp.zeros((action_dim,), jnp.float32)
    return params


def pack_params(params, num_layers, action_dim):
    """One-time layout work: transpose, stack, fuse heads, build clamp rows."""
    hidden = params["w1"].shape[0]
    w1t = jnp.asarray(params["w1"].T)                                  # (obs, hidden)
    wh = jnp.stack([params[f"w{l}"].T for l in range(2, num_layers + 1)],
                   axis=0)                                             # (L-1, hidden, hidden)
    b_all = jnp.stack([params[f"b{l}"] for l in range(1, num_layers + 1)],
                      axis=0)                                          # (L, hidden)

    # Fused narrow head: (hidden, 2A) and (1, 2A); cols [0,A)=mean, [A,2A)=log_std.
    w_head = jnp.concatenate([params["wm"].T, params["ws"].T], axis=1)       # (hidden, 2A)
    b_head = jnp.concatenate([params["bm"], params["bs"]], axis=0)[None, :]  # (1, 2A)

    # Per-lane clamp bounds (mean cols unclamped via +/- BIG).
    lo_head = jnp.concatenate(
        [jnp.full((1, action_dim), -_BIG, jnp.float32),
         jnp.full((1, action_dim), LOG_STD_MIN, jnp.float32)], axis=1)       # (1, 2A)
    hi_head = jnp.concatenate(
        [jnp.full((1, action_dim), _BIG, jnp.float32),
         jnp.full((1, action_dim), LOG_STD_MAX, jnp.float32)], axis=1)       # (1, 2A)

    return {"w1t": w1t, "wh": wh, "b_all": b_all,
            "w_head": w_head, "b_head": b_head,
            "lo_head": lo_head, "hi_head": hi_head}


def _choose_tile(B, tm_cap):
    """Batch tile: multiple of 8 (or == B), >=2 grid steps for large batches."""
    if B > tm_cap:
        return tm_cap
    if B >= 256:
        # Split into (at least) 2 tiles so both v7x TensorCores get work.
        half = ((-(-B // 2)) + 7) // 8 * 8
        return min(half, tm_cap)
    # Tiny batch: single full-batch tile (step-overhead bound anyway).
    return B


@functools.partial(jax.jit, static_argnames=("action_dim", "num_layers", "tm_cap"))
def gaussian_policy_forward(state, packed, *, action_dim, num_layers=2, tm_cap=4096):
    B, obs_dim = state.shape
    hidden = packed["w1t"].shape[1]
    two_a = 2 * action_dim
    L = num_layers

    tm = _choose_tile(B, tm_cap)
    grid = (pl.cdiv(B, tm),)

    kernel = functools.partial(_policy_kernel, num_layers=L)

    out = pl.pallas_call(
        kernel,
        out_shape=jax.ShapeDtypeStruct((B, two_a), jnp.float32),
        grid=grid,
        in_specs=[
            pl.BlockSpec((tm, obs_dim), lambda i: (i, 0)),               # state tile
            pl.BlockSpec((obs_dim, hidden), lambda i: (0, 0)),           # W1^T (resident)
            pl.BlockSpec((L - 1, hidden, hidden), lambda i: (0, 0, 0)),  # hidden W^T stack
            pl.BlockSpec((L, hidden), lambda i: (0, 0)),                 # biases stack
            pl.BlockSpec((hidden, two_a), lambda i: (0, 0)),             # fused head W
            pl.BlockSpec((1, two_a), lambda i: (0, 0)),                  # fused head b
            pl.BlockSpec((1, two_a), lambda i: (0, 0)),                  # clamp lo row
            pl.BlockSpec((1, two_a), lambda i: (0, 0)),                  # clamp hi row
        ],
        out_specs=pl.BlockSpec((tm, two_a), lambda i: (i, 0)),
        compiler_params=pltpu.CompilerParams(
            dimension_semantics=("parallel",),
        ),
    )(state, packed["w1t"], packed["wh"], packed["b_all"],
      packed["w_head"], packed["b_head"], packed["lo_head"], packed["hi_head"])

    mean = out[:, :action_dim]
    log_std = out[:, action_dim:two_a]
    return mean, log_std


def _reference(state, params, num_layers):
    """Plain-JAX reference (PyTorch-layout weights) for correctness check."""
    x = _selu(state @ params["w1"].T + params["b1"])
    for l in range(2, num_layers + 1):
        x = _selu(x @ params[f"w{l}"].T + params[f"b{l}"])
    mean = x @ params["wm"].T + params["bm"]
    log_std = jnp.clip(x @ params["ws"].T + params["bs"], LOG_STD_MIN, LOG_STD_MAX)
    return mean, log_std


if __name__ == "__main__":
    B = 8
    OBS_DIM = 16
    ACTION_DIM = 4
    HIDDEN = 32
    NUM_LAYERS = 2   # module default

    key = jax.random.PRNGKey(0)
    k_state, k_params, k_bias = jax.random.split(key, 3)

    state = jax.random.normal(k_state, (B, OBS_DIM), jnp.float32)
    params = init_params(k_params, OBS_DIM, ACTION_DIM, HIDDEN, NUM_LAYERS)

    # The module initializes biases to 0; perturb them here so the test also
    # exercises the bias path (forward semantics are init-independent).
    bias_names = [f"b{l}" for l in range(1, NUM_LAYERS + 1)] + ["bm", "bs"]
    bkeys = jax.random.split(k_bias, len(bias_names))
    for k, name in zip(bkeys, bias_names):
        params[name] = 0.1 * jax.random.normal(k, params[name].shape, jnp.float32)

    packed = pack_params(params, NUM_LAYERS, ACTION_DIM)

    mean, log_std = gaussian_policy_forward(
        state, packed, action_dim=ACTION_DIM, num_layers=NUM_LAYERS)
    jax.block_until_ready((mean, log_std))

    assert mean.shape == (B, ACTION_DIM)
    assert log_std.shape == (B, ACTION_DIM)

    ref_mean, ref_log_std = _reference(state, params, NUM_LAYERS)
    assert jnp.allclose(mean, ref_mean, atol=1e-5, rtol=1e-5)
    assert jnp.allclose(log_std, ref_log_std, atol=1e-5, rtol=1e-5)
    assert bool(jnp.all(log_std >= LOG_STD_MIN)) and bool(jnp.all(log_std <= LOG_STD_MAX))

    print("KERNEL_OK")
</pallas_src>

<mosaic_0001>
module attributes {stable_mosaic.version = 11 : i64} {
  func.func @_policy_kernel(%arg0: i32, %arg1: memref<8x16xf32, #tpu.memory_space<vmem>>, %arg2: memref<16x32xf32, #tpu.memory_space<vmem>>, %arg3: memref<1x32x32xf32, #tpu.memory_space<vmem>>, %arg4: memref<2x32xf32, #tpu.memory_space<vmem>>, %arg5: memref<32x8xf32, #tpu.memory_space<vmem>>, %arg6: memref<1x8xf32, #tpu.memory_space<vmem>>, %arg7: memref<1x8xf32, #tpu.memory_space<vmem>>, %arg8: memref<1x8xf32, #tpu.memory_space<vmem>>, %arg9: memref<8x8xf32, #tpu.memory_space<vmem>>) attributes {dimension_semantics = [#tpu.dimension_semantics<parallel>], iteration_bounds = array<i64: 1>, scalar_prefetch = 0 : i64, scratch_operands = 0 : i64, tpu.core_type = #tpu.core_type<tc>, window_params = [{transform_indices = @transform_0, window_bounds = array<i64: 8, 16>}, {pipeline_mode = #tpu.pipeline_mode<synchronous>, transform_indices = @transform_1, window_bounds = array<i64: 16, 32>}, {pipeline_mode = #tpu.pipeline_mode<synchronous>, transform_indices = @transform_2, window_bounds = array<i64: 1, 32, 32>}, {pipeline_mode = #tpu.pipeline_mode<synchronous>, transform_indices = @transform_3, window_bounds = array<i64: 2, 32>}, {pipeline_mode = #tpu.pipeline_mode<synchronous>, transform_indices = @transform_4, window_bounds = array<i64: 32, 8>}, {pipeline_mode = #tpu.pipeline_mode<synchronous>, transform_indices = @transform_5, window_bounds = array<i64: 1, 8>}, {pipeline_mode = #tpu.pipeline_mode<synchronous>, transform_indices = @transform_6, window_bounds = array<i64: 1, 8>}, {pipeline_mode = #tpu.pipeline_mode<synchronous>, transform_indices = @transform_7, window_bounds = array<i64: 1, 8>}, {transform_indices = @transform_8, window_bounds = array<i64: 8, 8>}]} {
    %c0 = arith.constant 0 : index
    %c0_0 = arith.constant 0 : index
    %0 = vector.load %arg1[%c0, %c0_0] : memref<8x16xf32, #tpu.memory_space<vmem>>, vector<8x16xf32>
    %c0_1 = arith.constant 0 : index
    %c0_2 = arith.constant 0 : index
    %1 = vector.load %arg2[%c0_1, %c0_2] : memref<16x32xf32, #tpu.memory_space<vmem>>, vector<16x32xf32>
    %cst = arith.constant dense<0.000000e+00> : vector<8x32xf32>
    %2 = tpu.matmul %0, %1, %cst {dimension_numbers = #tpu.dot_dimension_numbers<[1], [0], [0], [1], [0, 0, 1, 1], [], []>} : vector<8x16xf32>, vector<16x32xf32>, vector<8x32xf32> -> vector<8x32xf32>
    %c0_3 = arith.constant 0 : index
    %c0_4 = arith.constant 0 : index
    %3 = vector.load %arg4[%c0_3, %c0_4] : memref<2x32xf32, #tpu.memory_space<vmem>>, vector<1x32xf32>
    %4 = vector.broadcast %3 : vector<1x32xf32> to vector<8x32xf32>
    %5 = arith.addf %2, %4 : vector<8x32xf32>
    %cst_5 = arith.constant 0.000000e+00 : f32
    %6 = vector.broadcast %cst_5 : f32 to vector<8x32xf32>
    %7 = arith.minimumf %5, %6 : vector<8x32xf32>
    %8 = math.exp %7 : vector<8x32xf32>
    %cst_6 = arith.constant 1.000000e+00 : f32
    %9 = vector.broadcast %cst_6 : f32 to vector<8x32xf32>
    %10 = arith.subf %8, %9 : vector<8x32xf32>
    %cst_7 = arith.constant 1.67326319 : f32
    %11 = vector.broadcast %cst_7 : f32 to vector<8x32xf32>
    %12 = arith.mulf %11, %10 : vector<8x32xf32>
    %cst_8 = arith.constant 0.000000e+00 : f32
    %13 = vector.broadcast %cst_8 : f32 to vector<8x32xf32>
    %14 = arith.cmpf ogt, %5, %13 : vector<8x32xf32>
    %15 = arith.select %14, %5, %12 : vector<8x32xi1>, vector<8x32xf32>
    %cst_9 = arith.constant 1.05070102 : f32
    %16 = vector.broadcast %cst_9 : f32 to vector<8x32xf32>
    %17 = arith.mulf %16, %15 : vector<8x32xf32>
    %c0_10 = arith.constant 0 : index
    %c0_11 = arith.constant 0 : index
    %c0_12 = arith.constant 0 : index
    %18 = vector.load %arg3[%c0_10, %c0_11, %c0_12] : memref<1x32x32xf32, #tpu.memory_space<vmem>>, vector<1x32x32xf32>
    %19 = vector.shape_cast %18 : vector<1x32x32xf32> to vector<32x32xf32>
    %c1 = arith.constant 1 : index
    %c0_13 = arith.constant 0 : index
    %20 = vector.load %arg4[%c1, %c0_13] : memref<2x32xf32, #tpu.memory_space<vmem>>, vector<1x32xf32>
    %cst_14 = arith.constant dense<0.000000e+00> : vector<8x32xf32>
    %21 = tpu.matmul %17, %19, %cst_14 {dimension_numbers = #tpu.dot_dimension_numbers<[1], [0], [0], [1], [0, 0, 1, 1], [], []>} : vector<8x32xf32>, vector<32x32xf32>, vector<8x32xf32> -> vector<8x32xf32>
    %22 = vector.broadcast %20 : vector<1x32xf32> to vector<8x32xf32>
    %23 = arith.addf %21, %22 : vector<8x32xf32>
    %cst_15 = arith.constant 0.000000e+00 : f32
    %24 = vector.broadcast %cst_15 : f32 to vector<8x32xf32>
    %25 = arith.minimumf %23, %24 : vector<8x32xf32>
    %26 = math.exp %25 : vector<8x32xf32>
    %cst_16 = arith.constant 1.000000e+00 : f32
    %27 = vector.broadcast %cst_16 : f32 to vector<8x32xf32>
    %28 = arith.subf %26, %27 : vector<8x32xf32>
    %cst_17 = arith.constant 1.67326319 : f32
    %29 = vector.broadcast %cst_17 : f32 to vector<8x32xf32>
    %30 = arith.mulf %29, %28 : vector<8x32xf32>
    %cst_18 = arith.constant 0.000000e+00 : f32
    %31 = vector.broadcast %cst_18 : f32 to vector<8x32xf32>
    %32 = arith.cmpf ogt, %23, %31 : vector<8x32xf32>
    %33 = arith.select %32, %23, %30 : vector<8x32xi1>, vector<8x32xf32>
    %cst_19 = arith.constant 1.05070102 : f32
    %34 = vector.broadcast %cst_19 : f32 to vector<8x32xf32>
    %35 = arith.mulf %34, %33 : vector<8x32xf32>
    %c0_20 = arith.constant 0 : index
    %c0_21 = arith.constant 0 : index
    %36 = vector.load %arg5[%c0_20, %c0_21] : memref<32x8xf32, #tpu.memory_space<vmem>>, vector<32x8xf32>
    %cst_22 = arith.constant dense<0.000000e+00> : vector<8x8xf32>
    %37 = tpu.matmul %35, %36, %cst_22 {dimension_numbers = #tpu.dot_dimension_numbers<[1], [0], [0], [1], [0, 0, 1, 1], [], []>} : vector<8x32xf32>, vector<32x8xf32>, vector<8x8xf32> -> vector<8x8xf32>
    %c0_23 = arith.constant 0 : index
    %c0_24 = arith.constant 0 : index
    %38 = vector.load %arg6[%c0_23, %c0_24] : memref<1x8xf32, #tpu.memory_space<vmem>>, vector<1x8xf32>
    %39 = vector.broadcast %38 : vector<1x8xf32> to vector<8x8xf32>
    %40 = arith.addf %37, %39 : vector<8x8xf32>
    %c0_25 = arith.constant 0 : index
    %c0_26 = arith.constant 0 : index
    %41 = vector.load %arg7[%c0_25, %c0_26] : memref<1x8xf32, #tpu.memory_space<vmem>>, vector<1x8xf32>
    %42 = vector.broadcast %41 : vector<1x8xf32> to vector<8x8xf32>
    %43 = arith.maximumf %40, %42 : vector<8x8xf32>
    %c0_27 = arith.constant 0 : index
    %c0_28 = arith.constant 0 : index
    %44 = vector.load %arg8[%c0_27, %c0_28] : memref<1x8xf32, #tpu.memory_space<vmem>>, vector<1x8xf32>
    %45 = vector.broadcast %44 : vector<1x8xf32> to vector<8x8xf32>
    %46 = arith.minimumf %43, %45 : vector<8x8xf32>
    %c0_29 = arith.constant 0 : index
    %c0_30 = arith.constant 0 : index
    %47 = vector.load %arg9[%c0_29, %c0_30] : memref<8x8xf32, #tpu.memory_space<vmem>>, vector<8x8xf32>
    tpu.vector_store %arg9[%c0_29, %c0_30], %46 {strides = array<i32>} : memref<8x8xf32, #tpu.memory_space<vmem>>, vector<8x8xf32>,
    return
  }
  func.func @transform_0(%arg0: i32) -> (i32, i32) {
    %c0_i32 = arith.constant 0 : i32
    %c0_i32_0 = arith.constant 0 : i32
    return %arg0, %c0_i32 : i32, i32
  }
  func.func @transform_1(%arg0: i32) -> (i32, i32) {
    %c0_i32 = arith.constant 0 : i32
    %c0_i32_0 = arith.constant 0 : i32
    %c0_i32_1 = arith.constant 0 : i32
    return %c0_i32, %c0_i32_0 : i32, i32
  }
  func.func @transform_2(%arg0: i32) -> (i32, i32, i32) {
    %c0_i32 = arith.constant 0 : i32
    %c0_i32_0 = arith.constant 0 : i32
    %c0_i32_1 = arith.constant 0 : i32
    %c0_i32_2 = arith.constant 0 : i32
    return %c0_i32, %c0_i32_0, %c0_i32_1 : i32, i32, i32
  }
  func.func @transform_3(%arg0: i32) -> (i32, i32) {
    %c0_i32 = arith.constant 0 : i32
    %c0_i32_0 = arith.constant 0 : i32
    %c0_i32_1 = arith.constant 0 : i32
    return %c0_i32, %c0_i32_0 : i32, i32
  }
  func.func @transform_4(%arg0: i32) -> (i32, i32) {
    %c0_i32 = arith.constant 0 : i32
    %c0_i32_0 = arith.constant 0 : i32
    %c0_i32_1 = arith.constant 0 : i32
    return %c0_i32, %c0_i32_0 : i32, i32
  }
  func.func @transform_5(%arg0: i32) -> (i32, i32) {
    %c0_i32 = arith.constant 0 : i32
    %c0_i32_0 = arith.constant 0 : i32
    %c0_i32_1 = arith.constant 0 : i32
    return %c0_i32, %c0_i32_0 : i32, i32
  }
  func.func @transform_6(%arg0: i32) -> (i32, i32) {
    %c0_i32 = arith.constant 0 : i32
    %c0_i32_0 = arith.constant 0 : i32
    %c0_i32_1 = arith.constant 0 : i32
    return %c0_i32, %c0_i32_0 : i32, i32
  }
  func.func @transform_7(%arg0: i32) -> (i32, i32) {
    %c0_i32 = arith.constant 0 : i32
    %c0_i32_0 = arith.constant 0 : i32
    %c0_i32_1 = arith.constant 0 : i32
    return %c0_i32, %c0_i32_0 : i32, i32
  }
  func.func @transform_8(%arg0: i32) -> (i32, i32) {
    %c0_i32 = arith.constant 0 : i32
    %c0_i32_0 = arith.constant 0 : i32
    return %arg0, %c0_i32 : i32, i32
  }
}

</mosaic_0001>

<llo_original>
// kernel: gaussian_policy_forward.1
$region0: #{gaussian_policy_forward.1}
  #allocation0 [shape = 'u32[]', space=smem, size = 0x4, offset = 0x4, fixed_abs, tag = 'smem constant byte address 0x4 - core index']
  #allocation1 [shape = 'u32[144,128]{1,0:T(1,128)}', space=vmem, size = 0x12000, scoped, tag = 'internal scratch']
  %s0 = inlined_call_operand.hbm [shape: f32[8,16], index: 0, kind: input, shape index: {}]
  %s1 = inlined_call_operand.vmem [shape: f32[16,32], index: 1, kind: input, shape index: {}]
  %s2 = inlined_call_operand.vmem [shape: f32[1,32,32], index: 2, kind: input, shape index: {}]
  %s3 = inlined_call_operand.vmem [shape: f32[2,32], index: 3, kind: input, shape index: {}]
  %s4 = inlined_call_operand.vmem [shape: f32[32,8], index: 4, kind: input, shape index: {}]
  %s5 = inlined_call_operand.vmem [shape: f32[1,8], index: 5, kind: input, shape index: {}]
  %s6 = inlined_call_operand.vmem [shape: f32[1,8], index: 6, kind: input, shape index: {}]
  %s7 = inlined_call_operand.hbm [shape: f32[1,8], index: 7, kind: input, shape index: {}]
  %s8 = inlined_call_operand.vmem [shape: f32[8,8], index: 8, kind: output, shape index: {}]
  %s9 = sld [smem:[#allocation0]]
  $region50: #{gaussian_policy_forward.1} parent=0
    _
  %s11 = ssub.s32 1, %s9
  %s12 = scalar_select 0, %s11, %s9
  $region1: #{gaussian_policy_forward.1} parent=0
    #allocation2 [shape = 'u8[4096]{0}', space=vmem, size = 0x1000, scoped, tag = 'input window, operand 0, single buffered']
    #allocation3 [shape = 's32[1]{0}', space=sflag, size = 0x4, scoped, tag = 'scoped memory for gaussian_policy_forward.1']
    #allocation4 [shape = 'u8[512]{0}', space=vmem, size = 0x400, scoped, tag = 'input window, operand 7, single buffered']
    #allocation5 [shape = 's32[1]{0}', space=sflag, size = 0x4, scoped, tag = 'scoped memory for gaussian_policy_forward.1']
    %13 = vsyncpa [#allocation3], 0
    %14 = vsyncpa [#allocation5], 0
    // Predicated region
    $region2: #{gaussian_policy_forward.1} parent=1 // pred_check
      _
    $region3: #{gaussian_policy_forward.1} parent=1 // pred_check_branch
      %16 = sbr.rel (0) target = $region5
    $region4: #{gaussian_policy_forward.1} parent=1 // pred_region
      %s18 = ssub.s32 128, 128
      %19 = vsyncadd [#allocation3], %s18
      %s21 = sshll.u32 [#allocation2], 4
      %s22 = int_to_ptr.vmem [resolvable:$true] %s21
      %24 = dma.hbm_to_vmem [thread:$0]  %s0, 128, %s22, [#allocation3]
    $region5: #{gaussian_policy_forward.1} parent=1 // pred_fallthru
      _
    // Predicated region
    $region6: #{gaussian_policy_forward.1} parent=1 // pred_check
      _
    $region7: #{gaussian_policy_forward.1} parent=1 // pred_check_branch
      %26 = sbr.rel (0) target = $region9
    $region8: #{gaussian_policy_forward.1} parent=1 // pred_region
      _
    $region9: #{gaussian_policy_forward.1} parent=1 // pred_fallthru
      _
    // Predicated region
    $region10: #{gaussian_policy_forward.1} parent=1 // pred_check
      _
    $region11: #{gaussian_policy_forward.1} parent=1 // pred_check_branch
      %28 = sbr.rel (0) target = $region13
    $region12: #{gaussian_policy_forward.1} parent=1 // pred_region
      _
    $region13: #{gaussian_policy_forward.1} parent=1 // pred_fallthru
      _
    // Predicated region
    $region14: #{gaussian_policy_forward.1} parent=1 // pred_check
      _
    $region15: #{gaussian_policy_forward.1} parent=1 // pred_check_branch
      %30 = sbr.rel (0) target = $region17
    $region16: #{gaussian_policy_forward.1} parent=1 // pred_region
      _
    $region17: #{gaussian_policy_forward.1} parent=1 // pred_fallthru
      _
    // Predicated region
    $region18: #{gaussian_policy_forward.1} parent=1 // pred_check
      _
    $region19: #{gaussian_policy_forward.1} parent=1 // pred_check_branch
      %32 = sbr.rel (0) target = $region21
    $region20: #{gaussian_policy_forward.1} parent=1 // pred_region
      _
    $region21: #{gaussian_policy_forward.1} parent=1 // pred_fallthru
      _
    // Predicated region
    $region22: #{gaussian_policy_forward.1} parent=1 // pred_check
      _
    $region23: #{gaussian_policy_forward.1} parent=1 // pred_check_branch
      %34 = sbr.rel (0) target = $region25
    $region24: #{gaussian_policy_forward.1} parent=1 // pred_region
      _
    $region25: #{gaussian_policy_forward.1} parent=1 // pred_fallthru
      _
    // Predicated region
    $region26: #{gaussian_policy_forward.1} parent=1 // pred_check
      _
    $region27: #{gaussian_policy_forward.1} parent=1 // pred_check_branch
      %36 = sbr.rel (0) target = $region29
    $region28: #{gaussian_policy_forward.1} parent=1 // pred_region
      _
    $region29: #{gaussian_policy_forward.1} parent=1 // pred_fallthru
      _
    // Predicated region
    $region30: #{gaussian_policy_forward.1} parent=1 // pred_check
      _
    $region31: #{gaussian_policy_forward.1} parent=1 // pred_check_branch
      %38 = sbr.rel (0) target = $region33
    $region32: #{gaussian_policy_forward.1} parent=1 // pred_region
      %s40 = ssub.s32 16, 16
      %41 = vsyncadd [#allocation5], %s40
      %s43 = sshll.u32 [#allocation4], 4
      %s44 = int_to_ptr.vmem [resolvable:$true] %s43
      %46 = dma.hbm_to_vmem [thread:$0]  %s7, 16, %s44, [#allocation5]
    $region33: #{gaussian_policy_forward.1} parent=1 // pred_fallthru
      _
    // Predicated region
    $region34: #{gaussian_policy_forward.1} parent=1 // pred_check
      _
    $region35: #{gaussian_policy_forward.1} parent=1 // pred_check_branch
      %48 = sbr.rel (0) target = $region37
    $region36: #{gaussian_policy_forward.1} parent=1 // pred_region
      %49 = dma.done [#allocation3], 128
    $region37: #{gaussian_policy_forward.1} parent=1 // pred_fallthru
      _
    // Predicated region
    $region38: #{gaussian_policy_forward.1} parent=1 // pred_check
      _
    $region39: #{gaussian_policy_forward.1} parent=1 // pred_check_branch
      %51 = sbr.rel (0) target = $region41
    $region40: #{gaussian_policy_forward.1} parent=1 // pred_region
      %52 = dma.done [#allocation5], 16
    $region41: #{gaussian_policy_forward.1} parent=1 // pred_fallthru
      _
    %v53 = vld [vmem:[#allocation2] sm:$0xff]
    %v54 = vld [vmem:[%s1] sm:$0xff]
    %v55 = vld [vmem:[%s1 + $0x8] sm:$0xff]
    %v56 = vld [vmem:[%s3] sm:$0x1]
    %v57 = vlaneseq
    %v58 = vshrl.u32 %v57, 7
    %v59 = vsub.s32 0, %v58
    %v60 = vrot.slane %v56, %v59
    %vm61 = vcmask 130048
    %v63 = vsel %vm61, %v53, 0
    %65 = vmatprep.subr.mxu0 0.0
    %66 = vmatpush1.msra.mxu0 0.0
    %67 = vmatprep.subr.mxu0 0.0
    %68 = vmatpush1.msra.mxu0 0.0
    %69 = vmatprep.subr.mxu0 0.0
    %70 = vmatpush1.msra.mxu0 0.0
    %71 = vmatprep.subr.mxu0 0.0
    %72 = vmatpush1.msra.mxu0 0.0
    %73 = vmatprep.subr.mxu0 0.0
    %74 = vmatpush1.msra.mxu0 0.0
    %75 = vmatprep.subr.mxu0 0.0
    %76 = vmatpush1.msra.mxu0 0.0
    %77 = vmatprep.subr.mxu0 0.0
    %78 = vmatpush1.msra.mxu0 0.0
    %79 = vmatprep.subr.mxu0 0.0
    %80 = vmatpush1.msra.mxu0 0.0
    %81 = vmatprep.subr.mxu0 0.0
    %82 = vmatpush1.msra.mxu0 0.0
    %83 = vmatprep.subr.mxu0 0.0
    %84 = vmatpush1.msra.mxu0 0.0
    %85 = vmatprep.subr.mxu0 0.0
    %86 = vmatpush1.msra.mxu0 0.0
    %87 = vmatprep.subr.mxu0 0.0
    %88 = vmatpush1.msra.mxu0 0.0
    %89 = vmatprep.subr.mxu0 0.0
    %90 = vmatpush1.msra.mxu0 0.0
    %91 = vmatprep.subr.mxu0 0.0
    %92 = vmatpush1.msra.mxu0 0.0
    %93 = vmatprep.subr.mxu0 0.0
    %94 = vmatpush1.msra.mxu0 %v55
    %95 = vmatprep.subr.mxu0 0.0
    %96 = vmatpush1.msra.mxu0 %v54
    %97 = vmatprep.subr.mxu0 0.0
    %98 = vmatpush2.msra.mxu0 0.0
    %99 = vmatprep.subr.mxu0 0.0
    %100 = vmatpush2.msra.mxu0 0.0
    %101 = vmatprep.subr.mxu0 0.0
    %102 = vmatpush2.msra.mxu0 0.0
    %103 = vmatprep.subr.mxu0 0.0
    %104 = vmatpush2.msra.mxu0 0.0
    %105 = vmatprep.subr.mxu0 0.0
    %106 = vmatpush2.msra.mxu0 0.0
    %107 = vmatprep.subr.mxu0 0.0
    %108 = vmatpush2.msra.mxu0 0.0
    %109 = vmatprep.subr.mxu0 0.0
    %110 = vmatpush2.msra.mxu0 0.0
    %111 = vmatprep.subr.mxu0 0.0
    %112 = vmatpush2.msra.mxu0 0.0
    %113 = vmatprep.subr.mxu0 0.0
    %114 = vmatpush2.msra.mxu0 0.0
    %115 = vmatprep.subr.mxu0 0.0
    %116 = vmatpush2.msra.mxu0 0.0
    %117 = vmatprep.subr.mxu0 0.0
    %118 = vmatpush2.msra.mxu0 0.0
    %119 = vmatprep.subr.mxu0 0.0
    %120 = vmatpush2.msra.mxu0 0.0
    %121 = vmatprep.subr.mxu0 0.0
    %122 = vmatpush2.msra.mxu0 0.0
    %123 = vmatprep.subr.mxu0 0.0
    %124 = vmatpush2.msra.mxu0 0.0
    %125 = vmatprep.subr.mxu0 0.0
    %126 = vmatpush2.msra.mxu0 0.0
    %127 = vmatprep.subr.mxu0 0.0
    %128 = vmatpush2.msra.mxu0 0.0
    %129 = vmatprep.mubr.f32.mxu0 0.0
    %130 = vmatmul.mubr.f32.gmra.mxu0 %v63
    %v131 = vpop.f32.mrf.mxu0
    %v132 = vadd.f32 %v60, %v131
    %v133 = vpop.f32.mrf.mxu0
    %134 = vdwg.mxu0
    %v135 = vmin.f32 %v132, 0.0
    %v136 = vmul.f32 %v135, 1.442695
    %v137 = vpow.pop %v136
    %v138 = vsub.f32 %v137, 1.0
    %v139 = vmul.f32 %v138, 1.6732632
    %vm140 = vcmp.gt.f32.partialorder %v132, 0.0
    %v141 = vsel %vm140, %v132, %v139
    %v142 = vmul.f32 %v141, 1.050701
    %v143 = vld [vmem:[%s2] sm:$0xff]
    %v144 = vld [vmem:[%s2 + $0x8] sm:$0xff]
    %v145 = vld [vmem:[%s2 + $0x10] sm:$0xff]
    %v146 = vld [vmem:[%s2 + $0x18] sm:$0xff]
    %v147 = vld [vmem:[%s3 + $0x1] sm:$0x1]
    %v148 = vlaneseq
    %v149 = vshrl.u32 %v148, 7
    %v150 = vsub.s32 0, %v149
    %v151 = vrot.slane %v147, %v150
    %vm152 = vcmask 261120
    %v154 = vsel %vm152, %v142, 0
    %156 = vmatprep.subr.mxu0 0.0
    %157 = vmatpush1.msra.mxu0 0.0
    %158 = vmatprep.subr.mxu0 0.0
    %159 = vmatpush1.msra.mxu0 0.0
    %160 = vmatprep.subr.mxu0 0.0
    %161 = vmatpush1.msra.mxu0 0.0
    %162 = vmatprep.subr.mxu0 0.0
    %163 = vmatpush1.msra.mxu0 0.0
    %164 = vmatprep.subr.mxu0 0.0
    %165 = vmatpush1.msra.mxu0 0.0
    %166 = vmatprep.subr.mxu0 0.0
    %167 = vmatpush1.msra.mxu0 0.0
    %168 = vmatprep.subr.mxu0 0.0
    %169 = vmatpush1.msra.mxu0 0.0
    %170 = vmatprep.subr.mxu0 0.0
    %171 = vmatpush1.msra.mxu0 0.0
    %172 = vmatprep.subr.mxu0 0.0
    %173 = vmatpush1.msra.mxu0 0.0
    %174 = vmatprep.subr.mxu0 0.0
    %175 = vmatpush1.msra.mxu0 0.0
    %176 = vmatprep.subr.mxu0 0.0
    %177 = vmatpush1.msra.mxu0 0.0
    %178 = vmatprep.subr.mxu0 0.0
    %179 = vmatpush1.msra.mxu0 0.0
    %180 = vmatprep.subr.mxu0 0.0
    %181 = vmatpush1.msra.mxu0 %v146
    %182 = vmatprep.subr.mxu0 0.0
    %183 = vmatpush1.msra.mxu0 %v145
    %184 = vmatprep.subr.mxu0 0.0
    %185 = vmatpush1.msra.mxu0 %v144
    %186 = vmatprep.subr.mxu0 0.0
    %187 = vmatpush1.msra.mxu0 %v143
    %188 = vmatprep.subr.mxu0 0.0
    %189 = vmatpush2.msra.mxu0 0.0
    %190 = vmatprep.subr.mxu0 0.0
    %191 = vmatpush2.msra.mxu0 0.0
    %192 = vmatprep.subr.mxu0 0.0
    %193 = vmatpush2.msra.mxu0 0.0
    %194 = vmatprep.subr.mxu0 0.0
    %195 = vmatpush2.msra.mxu0 0.0
    %196 = vmatprep.subr.mxu0 0.0
    %197 = vmatpush2.msra.mxu0 0.0
    %198 = vmatprep.subr.mxu0 0.0
    %199 = vmatpush2.msra.mxu0 0.0
    %200 = vmatprep.subr.mxu0 0.0
    %201 = vmatpush2.msra.mxu0 0.0
    %202 = vmatprep.subr.mxu0 0.0
    %203 = vmatpush2.msra.mxu0 0.0
    %204 = vmatprep.subr.mxu0 0.0
    %205 = vmatpush2.msra.mxu0 0.0
    %206 = vmatprep.subr.mxu0 0.0
    %207 = vmatpush2.msra.mxu0 0.0
    %208 = vmatprep.subr.mxu0 0.0
    %209 = vmatpush2.msra.mxu0 0.0
    %210 = vmatprep.subr.mxu0 0.0
    %211 = vmatpush2.msra.mxu0 0.0
    %212 = vmatprep.subr.mxu0 0.0
    %213 = vmatpush2.msra.mxu0 0.0
    %214 = vmatprep.subr.mxu0 0.0
    %215 = vmatpush2.msra.mxu0 0.0
    %216 = vmatprep.subr.mxu0 0.0
    %217 = vmatpush2.msra.mxu0 0.0
    %218 = vmatprep.subr.mxu0 0.0
    %219 = vmatpush2.msra.mxu0 0.0
    %220 = vmatprep.mubr.f32.mxu0 0.0
    %221 = vmatmul.mubr.f32.gmra.mxu0 %v154
    %v222 = vpop.f32.mrf.mxu0
    %v223 = vadd.f32 %v151, %v222
    %v224 = vpop.f32.mrf.mxu0
    %225 = vdwg.mxu0
    %v226 = vmin.f32 %v223, 0.0
    %v227 = vmul.f32 %v226, 1.442695
    %v228 = vpow.pop %v227
    %v229 = vsub.f32 %v228, 1.0
    %v230 = vmul.f32 %v229, 1.6732632
    %vm231 = vcmp.gt.f32.partialorder %v223, 0.0
    %v232 = vsel %vm231, %v223, %v230
    %v233 = vmul.f32 %v232, 1.050701
    %v234 = vld [vmem:[%s4] sm:$0xff]
    %v235 = vld [vmem:[%s4 + $0x8] sm:$0xff]
    %v236 = vld [vmem:[%s4 + $0x10] sm:$0xff]
    %v237 = vld [vmem:[%s4 + $0x18] sm:$0xff]
    %v238 = vld [vmem:[%s5] sm:$0x1]
    %v240 = vlaneseq
    %v241 = vshrl.u32 %v240, 7
    %v242 = vsub.s32 0, %v241
    %v243 = vrot.slane %v238, %v242
    %v246 = vsel %vm152, %v233, 0
    %248 = vmatprep.subr.mxu0 0.0
    %249 = vmatpush1.msra.mxu0 0.0
    %250 = vmatprep.subr.mxu0 0.0
    %251 = vmatpush1.msra.mxu0 0.0
    %252 = vmatprep.subr.mxu0 0.0
    %253 = vmatpush1.msra.mxu0 0.0
    %254 = vmatprep.subr.mxu0 0.0
    %255 = vmatpush1.msra.mxu0 0.0
    %256 = vmatprep.subr.mxu0 0.0
    %257 = vmatpush1.msra.mxu0 0.0
    %258 = vmatprep.subr.mxu0 0.0
    %259 = vmatpush1.msra.mxu0 0.0
    %260 = vmatprep.subr.mxu0 0.0
    %261 = vmatpush1.msra.mxu0 0.0
    %262 = vmatprep.subr.mxu0 0.0
    %263 = vmatpush1.msra.mxu0 0.0
    %264 = vmatprep.subr.mxu0 0.0
    %265 = vmatpush1.msra.mxu0 0.0
    %266 = vmatprep.subr.mxu0 0.0
    %267 = vmatpush1.msra.mxu0 0.0
    %268 = vmatprep.subr.mxu0 0.0
    %269 = vmatpush1.msra.mxu0 0.0
    %270 = vmatprep.subr.mxu0 0.0
    %271 = vmatpush1.msra.mxu0 0.0
    %272 = vmatprep.subr.mxu0 0.0
    %273 = vmatpush1.msra.mxu0 %v237
    %274 = vmatprep.subr.mxu0 0.0
    %275 = vmatpush1.msra.mxu0 %v236
    %276 = vmatprep.subr.mxu0 0.0
    %277 = vmatpush1.msra.mxu0 %v235
    %278 = vmatprep.subr.mxu0 0.0
    %279 = vmatpush1.msra.mxu0 %v234
    %280 = vmatprep.subr.mxu0 0.0
    %281 = vmatpush2.msra.mxu0 0.0
    %282 = vmatprep.subr.mxu0 0.0
    %283 = vmatpush2.msra.mxu0 0.0
    %284 = vmatprep.subr.mxu0 0.0
    %285 = vmatpush2.msra.mxu0 0.0
    %286 = vmatprep.subr.mxu0 0.0
    %287 = vmatpush2.msra.mxu0 0.0
    %288 = vmatprep.subr.mxu0 0.0
    %289 = vmatpush2.msra.mxu0 0.0
    %290 = vmatprep.subr.mxu0 0.0
    %291 = vmatpush2.msra.mxu0 0.0
    %292 = vmatprep.subr.mxu0 0.0
    %293 = vmatpush2.msra.mxu0 0.0
    %294 = vmatprep.subr.mxu0 0.0
    %295 = vmatpush2.msra.mxu0 0.0
    %296 = vmatprep.subr.mxu0 0.0
    %297 = vmatpush2.msra.mxu0 0.0
    %298 = vmatprep.subr.mxu0 0.0
    %299 = vmatpush2.msra.mxu0 0.0
    %300 = vmatprep.subr.mxu0 0.0
    %301 = vmatpush2.msra.mxu0 0.0
    %302 = vmatprep.subr.mxu0 0.0
    %303 = vmatpush2.msra.mxu0 0.0
    %304 = vmatprep.subr.mxu0 0.0
    %305 = vmatpush2.msra.mxu0 0.0
    %306 = vmatprep.subr.mxu0 0.0
    %307 = vmatpush2.msra.mxu0 0.0
    %308 = vmatprep.subr.mxu0 0.0
    %309 = vmatpush2.msra.mxu0 0.0
    %310 = vmatprep.subr.mxu0 0.0
    %311 = vmatpush2.msra.mxu0 0.0
    %312 = vmatprep.mubr.f32.mxu0 0.0
    %313 = vmatmul.mubr.f32.gmra.mxu0 %v246
    %v314 = vpop.f32.mrf.mxu0
    %v315 = vadd.f32 %v243, %v314
    %v316 = vpop.f32.mrf.mxu0
    %317 = vdwg.mxu0
    %v318 = vld [vmem:[%s6] sm:$0x1]
    %v320 = vlaneseq
    %v321 = vshrl.u32 %v320, 7
    %v322 = vsub.s32 0, %v321
    %v323 = vrot.slane %v318, %v322
    %v325 = vmax.f32 %v315, %v323
    %v326 = vld [vmem:[#allocation4] sm:$0x1]
    %v328 = vlaneseq
    %v329 = vshrl.u32 %v328, 7
    %v330 = vsub.s32 0, %v329
    %v331 = vrot.slane %v326, %v330
    %v333 = vmin.f32 %v325, %v331
    %vm334 = vcmask 64512
    %335 = vst.msk [vmem:[%s8] sm:$0xff] %vm334, %v333
    // Predicated region
    $region42: #{gaussian_policy_forward.1} parent=1 // pred_check
      _
    $region43: #{gaussian_policy_forward.1} parent=1 // pred_check_branch
      %337 = sbr.rel (0) target = $region45
    $region44: #{gaussian_policy_forward.1} parent=1 // pred_region
      _
    $region45: #{gaussian_policy_forward.1} parent=1 // pred_fallthru
      _
    // Predicated region
    $region46: #{gaussian_policy_forward.1} parent=1 // pred_check
      _
    $region47: #{gaussian_policy_forward.1} parent=1 // pred_check_branch
      %339 = sbr.rel (0) target = $region49
    $region48: #{gaussian_policy_forward.1} parent=1 // pred_region
      _
    $region49: #{gaussian_policy_forward.1} parent=1 // pred_fallthru
      _
    %340 = vsyncpa [#allocation3], 1
    %341 = vsyncpa [#allocation5], 1

</llo_original>
